<compile_context>
chip_gen: v7x
topology: tpu7x:2x2x1
jax: 0.10.0
libtpu: 0.0.40
codegen_flags: <defaults>
</compile_context>

<pallas_src>
import functools

import jax
import jax.numpy as jnp
from jax import lax
from jax.experimental import pallas as pl
from jax.experimental.pallas import tpu as pltpu

LANE = 128


def _as_i32(v):
    """Python int -> int32 constant with two's-complement wrap."""
    v &= 0xFFFFFFFF
    if v >= (1 << 31):
        v -= 1 << 32
    return jnp.int32(v)


def _srl(k, n):
    """Logical right shift of an int32 array by a static amount n."""
    mask = jnp.int32((1 << (32 - n)) - 1)
    return (k >> n) & mask


def _dropout(x, seed, row_offset, drop_prob):
    """PyTorch-style dropout: zero w.p. p, scale survivors by 1/(1-p).

    murmur-style fmix32 hash of (global_row, col, seed) -> every grid tile
    gets distinct, deterministic random bits without pltpu.prng_* state.
    """
    if drop_prob >= 1.0:          # guard p == 1.0 (would divide by zero)
        return jnp.zeros_like(x)
    shape = x.shape
    row = lax.broadcasted_iota(jnp.int32, shape, 0) + row_offset
    col = lax.broadcasted_iota(jnp.int32, shape, 1)
    k = (row * _as_i32(0x9E3779B1)
         + col * _as_i32(0x85EBCA77)
         + seed * _as_i32(0x2545F491))
    # fmix32 (int32 arithmetic wraps mod 2^32; logical shifts emulated)
    k = k ^ _srl(k, 16)
    k = k * _as_i32(0x7FEB352D)
    k = k ^ _srl(k, 15)
    k = k * _as_i32(0x846CA68B)
    k = k ^ _srl(k, 16)
    # top 23 bits -> uniform float in [0, 1)
    u = _srl(k, 9).astype(jnp.float32) * jnp.float32(1.0 / (1 << 23))
    keep = u >= jnp.float32(drop_prob)
    scale = jnp.asarray(1.0 / (1.0 - drop_prob), dtype=x.dtype)
    return jnp.where(keep, x * scale, jnp.zeros_like(x))


def _logits_block(x_ref, w_ref, b_ref, seed_ref, *, drop_prob, training, tile_b):
    x = x_ref[...]                                            # (TILE_B, H)
    if training and drop_prob > 0.0:
        row_off = pl.program_id(0) * tile_b
        x = _dropout(x, seed_ref[0], row_off, drop_prob)
    # MXU matmul in the stored dtype, f32 accumulation; bias added in f32.
    logits = jnp.dot(x, w_ref[...], preferred_element_type=jnp.float32)
    return logits + b_ref[...].astype(jnp.float32)            # (TILE_B, L_PAD)


# ---------------------------------------------------------------------------
# Kernel A: dropout + linear classifier (no labels)
# ---------------------------------------------------------------------------
def _classifier_kernel(seed_ref, x_ref, w_ref, b_ref, out_ref,
                       *, drop_prob, training, tile_b):
    logits = _logits_block(x_ref, w_ref, b_ref, seed_ref,
                           drop_prob=drop_prob, training=training,
                           tile_b=tile_b)
    out_ref[...] = logits.astype(out_ref.dtype)


# ---------------------------------------------------------------------------
# Kernel B: classifier + fused CrossEntropyLoss epilogue (mean reduction)
# ---------------------------------------------------------------------------
def _classifier_ce_kernel(seed_ref, x_ref, w_ref, b_ref, labels_ref,
                          out_ref, loss_ref, acc_ref,
                          *, drop_prob, training, tile_b, num_labels, batch):
    i = pl.program_id(0)
    row_off = i * tile_b

    logits = _logits_block(x_ref, w_ref, b_ref, seed_ref,
                           drop_prob=drop_prob, training=training,
                           tile_b=tile_b)
    out_ref[...] = logits.astype(out_ref.dtype)

    # --- CE epilogue: mask padded lanes and padded/edge rows ---------------
    col = lax.broadcasted_iota(jnp.int32, logits.shape, 1)
    lane_valid = col < num_labels
    masked = jnp.where(lane_valid, logits, jnp.float32(-1e30))
    m = jnp.max(masked, axis=-1, keepdims=True)
    lse = m + jnp.log(jnp.sum(jnp.exp(masked - m), axis=-1, keepdims=True))

    labels = labels_ref[...]                                   # (TILE_B, 1)
    onehot = (col == labels) & lane_valid
    true_logit = jnp.sum(jnp.where(onehot, logits, jnp.float32(0.0)),
                         axis=-1, keepdims=True)

    row = lax.broadcasted_iota(jnp.int32, lse.shape, 0) + row_off
    per_row = jnp.where(row < batch, lse - true_logit, jnp.float32(0.0))
    partial = jnp.sum(per_row)

    @pl.when(i == 0)
    def _init():
        acc_ref[0, 0] = jnp.float32(0.0)

    acc_ref[0, 0] += partial

    @pl.when(i == pl.num_programs(0) - 1)
    def _finalize():
        loss_ref[0, 0] = acc_ref[0, 0] / jnp.float32(batch)


# ---------------------------------------------------------------------------
# Wrappers
# ---------------------------------------------------------------------------
def _choose_tile_b(batch, hidden, itemsize=4):
    """Batch tile: whole batch if small, else the largest 8-aligned tile whose
    x slab stays within an ~8 MiB VMEM budget (double-buffered -> 16 MiB),
    capped at 512 rows (HBM-roofline sweet spot)."""
    if batch <= 512:
        return batch
    bytes_per_row = max(hidden * itemsize, 1)
    tb = (8 << 20) // bytes_per_row
    tb = max(64, min(512, (tb // 8) * 8))
    return tb


def classifier_forward(pooled, w_pad, b_pad, seed, *, drop_prob, training,
                       num_labels, tile_b=None):
    B, H = pooled.shape
    l_pad = w_pad.shape[1]
    tb = tile_b or _choose_tile_b(B, H, pooled.dtype.itemsize)
    nb = pl.cdiv(B, tb)
    kernel = functools.partial(_classifier_kernel, drop_prob=float(drop_prob),
                               training=bool(training), tile_b=tb)
    out = pl.pallas_call(
        kernel,
        out_shape=jax.ShapeDtypeStruct((B, l_pad), pooled.dtype),
        grid=(nb,),
        in_specs=[
            pl.BlockSpec(memory_space=pltpu.MemorySpace.SMEM),       # seed (1,)
            pl.BlockSpec((tb, H), lambda i: (i, 0)),                 # x tile
            pl.BlockSpec((H, l_pad), lambda i: (0, 0)),              # resident W_t
            pl.BlockSpec((1, l_pad), lambda i: (0, 0)),              # resident bias
        ],
        out_specs=pl.BlockSpec((tb, l_pad), lambda i: (i, 0)),
        compiler_params=pltpu.CompilerParams(
            dimension_semantics=("parallel",)),
    )(seed, pooled, w_pad, b_pad)
    return out[:, :num_labels]


def classifier_ce_forward(pooled, w_pad, b_pad, labels, seed, *, drop_prob,
                          training, num_labels, tile_b=None):
    B, H = pooled.shape
    l_pad = w_pad.shape[1]
    tb = tile_b or _choose_tile_b(B, H, pooled.dtype.itemsize)
    nb = pl.cdiv(B, tb)
    labels2d = labels.astype(jnp.int32).reshape(B, 1)
    kernel = functools.partial(_classifier_ce_kernel,
                               drop_prob=float(drop_prob),
                               training=bool(training), tile_b=tb,
                               num_labels=int(num_labels), batch=int(B))
    logits, loss = pl.pallas_call(
        kernel,
        out_shape=(jax.ShapeDtypeStruct((B, l_pad), pooled.dtype),
                   jax.ShapeDtypeStruct((1, 1), jnp.float32)),
        grid=(nb,),
        in_specs=[
            pl.BlockSpec(memory_space=pltpu.MemorySpace.SMEM),       # seed
            pl.BlockSpec((tb, H), lambda i: (i, 0)),                 # x tile
            pl.BlockSpec((H, l_pad), lambda i: (0, 0)),              # resident W_t
            pl.BlockSpec((1, l_pad), lambda i: (0, 0)),              # resident bias
            pl.BlockSpec((tb, 1), lambda i: (i, 0)),                 # labels tile
        ],
        out_specs=(
            pl.BlockSpec((tb, l_pad), lambda i: (i, 0)),             # logits
            pl.BlockSpec(memory_space=pltpu.MemorySpace.SMEM),       # scalar loss
        ),
        scratch_shapes=[pltpu.SMEM((1, 1), jnp.float32)],            # loss acc
        compiler_params=pltpu.CompilerParams(
            dimension_semantics=("arbitrary",)),                     # reduction
    )(seed, pooled, w_pad, b_pad, labels2d)
    return loss[0, 0], logits[:, :num_labels]


# ---------------------------------------------------------------------------
# Module wrapper (parameter setup / glue in plain JAX)
# ---------------------------------------------------------------------------
class ClassificationBase:
    def __init__(self, drop_prob, hidden_size, num_labels, key,
                 param_dtype=jnp.float32):
        self.drop_prob = float(drop_prob)
        self.hidden_size = hidden_size
        self.num_labels = num_labels
        self.l_pad = ((num_labels + LANE - 1) // LANE) * LANE
        kw, kb = jax.random.split(key)
        # nn.Linear(hidden_size, num_labels): W, b ~ U(-k, k), k = 1/sqrt(H)
        bound = 1.0 / (hidden_size ** 0.5)
        w = jax.random.uniform(kw, (num_labels, hidden_size),
                               jnp.float32, -bound, bound)
        b = jax.random.uniform(kb, (num_labels,), jnp.float32, -bound, bound)
        # Store W transposed (H, L), zero-padded to 128 lanes, already in the
        # dtype the MXU will consume (bf16 possible via param_dtype).
        w_pad = jnp.zeros((hidden_size, self.l_pad), jnp.float32)
        w_pad = w_pad.at[:, :num_labels].set(w.T)
        b_pad = jnp.zeros((1, self.l_pad), jnp.float32)
        b_pad = b_pad.at[:, :num_labels].set(b)
        self.w_t = w_pad.astype(param_dtype)
        self.bias = b_pad                      # bias is added in f32 after dot
        self.w_full = w                        # unpadded, for reference checks
        self.b_full = b

    def forward(self, pooled_output, labels=None, *, training=False, seed=0,
                tile_b=None):
        seed_arr = jnp.asarray([seed], dtype=jnp.int32)
        if labels is None:
            return classifier_forward(
                pooled_output, self.w_t, self.bias, seed_arr,
                drop_prob=self.drop_prob, training=training,
                num_labels=self.num_labels, tile_b=tile_b)
        return classifier_ce_forward(
            pooled_output, self.w_t, self.bias, labels, seed_arr,
            drop_prob=self.drop_prob, training=training,
            num_labels=self.num_labels, tile_b=tile_b)


if __name__ == "__main__":
    key = jax.random.PRNGKey(0)
    k_param, k_x, k_lbl = jax.random.split(key, 3)

    B, H, L = 16, 32, 4
    model = ClassificationBase(drop_prob=0.1, hidden_size=H, num_labels=L,
                               key=k_param)

    pooled = jax.random.normal(k_x, (B, H), jnp.float32)
    labels = jax.random.randint(k_lbl, (B,), 0, L, jnp.int32)

    # Inference path (dropout inactive): logits only. tile_b=8 -> 2-step grid.
    logits = model.forward(pooled, training=False, tile_b=8)
    jax.block_until_ready(logits)
    assert logits.shape == (B, L)
    ref_logits = pooled @ model.w_full.T + model.b_full
    assert jnp.allclose(logits, ref_logits, atol=1e-4), "eval logits mismatch"

    # Training path: dropout active (deterministic per seed) + fused CE loss.
    loss, logits_tr = model.forward(pooled, labels, training=True, seed=123,
                                    tile_b=8)
    jax.block_until_ready((loss, logits_tr))
    # Recompute CE from the returned (post-dropout) logits in pure JAX.
    lse = jax.scipy.special.logsumexp(logits_tr.astype(jnp.float32), axis=-1)
    ref_loss = jnp.mean(lse - logits_tr[jnp.arange(B), labels].astype(jnp.float32))
    assert jnp.allclose(loss, ref_loss, atol=1e-4), "CE loss mismatch"

    # Eval-mode fused path (dropout = identity), single-tile grid.
    loss_eval, logits_eval = model.forward(pooled, labels, training=False)
    jax.block_until_ready((loss_eval, logits_eval))
    assert jnp.allclose(logits_eval, ref_logits, atol=1e-4)

    print("KERNEL_OK")
</pallas_src>

<mosaic_0001>
module attributes {stable_mosaic.version = 11 : i64} {
  func.func @_classifier_kernel(%arg0: i32, %arg1: memref<1xi32, #tpu.memory_space<smem>>, %arg2: memref<8x32xf32, #tpu.memory_space<vmem>>, %arg3: memref<32x128xf32, #tpu.memory_space<vmem>>, %arg4: memref<1x128xf32, #tpu.memory_space<vmem>>, %arg5: memref<8x128xf32, #tpu.memory_space<vmem>>) attributes {dimension_semantics = [#tpu.dimension_semantics<parallel>], iteration_bounds = array<i64: 2>, scalar_prefetch = 0 : i64, scratch_operands = 0 : i64, tpu.core_type = #tpu.core_type<tc>, window_params = [{transform_indices = @transform_0, window_bounds = array<i64: 1>}, {transform_indices = @transform_1, window_bounds = array<i64: 8, 32>}, {pipeline_mode = #tpu.pipeline_mode<synchronous>, transform_indices = @transform_2, window_bounds = array<i64: 32, 128>}, {pipeline_mode = #tpu.pipeline_mode<synchronous>, transform_indices = @transform_3, window_bounds = array<i64: 1, 128>}, {transform_indices = @transform_4, window_bounds = array<i64: 8, 128>}]} {
    %c0 = arith.constant 0 : index
    %c0_0 = arith.constant 0 : index
    %0 = vector.load %arg2[%c0, %c0_0] : memref<8x32xf32, #tpu.memory_space<vmem>>, vector<8x32xf32>
    %c0_1 = arith.constant 0 : index
    %c0_2 = arith.constant 0 : index
    %1 = vector.load %arg3[%c0_1, %c0_2] : memref<32x128xf32, #tpu.memory_space<vmem>>, vector<32x128xf32>
    %cst = arith.constant dense<0.000000e+00> : vector<8x128xf32>
    %2 = tpu.matmul %0, %1, %cst {dimension_numbers = #tpu.dot_dimension_numbers<[1], [0], [0], [1], [0, 0, 1, 1], [], []>} : vector<8x32xf32>, vector<32x128xf32>, vector<8x128xf32> -> vector<8x128xf32>
    %c0_3 = arith.constant 0 : index
    %c0_4 = arith.constant 0 : index
    %3 = vector.load %arg4[%c0_3, %c0_4] : memref<1x128xf32, #tpu.memory_space<vmem>>, vector<1x128xf32>
    %4 = vector.broadcast %3 : vector<1x128xf32> to vector<8x128xf32>
    %5 = arith.addf %2, %4 : vector<8x128xf32>
    %c0_5 = arith.constant 0 : index
    %c0_6 = arith.constant 0 : index
    %6 = vector.load %arg5[%c0_5, %c0_6] : memref<8x128xf32, #tpu.memory_space<vmem>>, vector<8x128xf32>
    tpu.vector_store %arg5[%c0_5, %c0_6], %5 {strides = array<i32>} : memref<8x128xf32, #tpu.memory_space<vmem>>, vector<8x128xf32>,
    return
  }
  func.func @transform_0(%arg0: i32) -> i32 {
    %c0_i32 = arith.constant 0 : i32
    %c0_i32_0 = arith.constant 0 : i32
    return %c0_i32 : i32
  }
  func.func @transform_1(%arg0: i32) -> (i32, i32) {
    %c0_i32 = arith.constant 0 : i32
    %c0_i32_0 = arith.constant 0 : i32
    return %arg0, %c0_i32 : i32, i32
  }
  func.func @transform_2(%arg0: i32) -> (i32, i32) {
    %c0_i32 = arith.constant 0 : i32
    %c0_i32_0 = arith.constant 0 : i32
    %c0_i32_1 = arith.constant 0 : i32
    return %c0_i32, %c0_i32_0 : i32, i32
  }
  func.func @transform_3(%arg0: i32) -> (i32, i32) {
    %c0_i32 = arith.constant 0 : i32
    %c0_i32_0 = arith.constant 0 : i32
    %c0_i32_1 = arith.constant 0 : i32
    return %c0_i32, %c0_i32_0 : i32, i32
  }
  func.func @transform_4(%arg0: i32) -> (i32, i32) {
    %c0_i32 = arith.constant 0 : i32
    %c0_i32_0 = arith.constant 0 : i32
    return %arg0, %c0_i32 : i32, i32
  }
}

</mosaic_0001>

<llo_original>
// kernel: tpu_custom_call.1
$region0: #{tpu_custom_call.1}
  #allocation0 [shape = 'u32[]', space=smem, size = 0x4, offset = 0x4, fixed_abs, tag = 'smem constant byte address 0x4 - core index']
  #allocation1 [shape = 'u32[144,128]{1,0:T(1,128)}', space=vmem, size = 0x12000, scoped, tag = 'internal scratch']
  #allocation2 [shape = 's32[1]{0:T(128)S(6)}', space=smem, size = 0x200, scoped, tag = 'scoped memory for tpu_custom_call.1']
  %s0 = inlined_call_operand.<no memory space> [shape: s32[1], index: 0, kind: input, shape index: {}]
  %s1 = inlined_call_operand.hbm [shape: f32[16,32], index: 1, kind: input, shape index: {}]
  %s2 = inlined_call_operand.hbm [shape: f32[32,128], index: 2, kind: input, shape index: {}]
  %s3 = inlined_call_operand.vmem [shape: f32[1,128], index: 3, kind: input, shape index: {}]
  %s4 = inlined_call_operand.hbm [shape: f32[16,128], index: 4, kind: output, shape index: {}]
  %s5 = sld [smem:[#allocation0]]
  $region57: #{tpu_custom_call.1} parent=0
    _
  %s7 = ssub.s32 1, %s5
  %s8 = scalar_select 0, %s7, %s5
  %9 = sst [smem:[#allocation2]] %s0
  $region1: #{tpu_custom_call.1} parent=0
    #allocation3 [shape = 'u8[8192]{0}', space=vmem, size = 0x2000, scoped, tag = 'input window, operand 1']
    #allocation4 [shape = 's32[2]{0}', space=sflag, size = 0x8, scoped, tag = 'scoped memory for tpu_custom_call.1']
    #allocation5 [shape = 's32[2]{0}', space=sflag, size = 0x8, scoped, tag = 'scoped memory for tpu_custom_call.1']
    #allocation6 [shape = 'u8[16384]{0}', space=vmem, size = 0x4000, scoped, tag = 'input window, operand 2, single buffered']
    #allocation7 [shape = 's32[1]{0}', space=sflag, size = 0x4, scoped, tag = 'scoped memory for tpu_custom_call.1']
    #allocation8 [shape = 'u8[8192]{0}', space=vmem, size = 0x2000, scoped, tag = 'output window, operand 0']
    %10 = vsyncpa [#allocation4], 0
    %s11 = scalar_lea.sflag [#allocation4], 1
    %12 = vsyncpa %s11, 0
    %13 = vsyncpa [#allocation7], 0
    %14 = vsyncpa [#allocation5], 0
    %s15 = scalar_lea.sflag [#allocation5], 1
    %16 = vsyncpa %s15, 0
    loop: start=0, step=1, limit=4
    $region2: #{tpu_custom_call.1} parent=1 // loop_pre_header
      _
    $region3: #{tpu_custom_call.1} parent=1 // loop_header
      %s18 = sphi 0, %s22
      %p19 = scmp.ge.s32.totalorder %s18, 4
      %s26 = sphi 0, %s26
      %s28 = sphi 0, %s26
      %s29 = sphi 0, %s28
      %s43 = sphi 0, %s29
      %s49 = sphi 0, %s51
      %s52 = sphi 0, %s49
      %s53 = sphi 0, %s52
      %s69 = sphi 0, %s53
      %s73 = sphi 0, %s73
      %s75 = sphi 0, %s73
      %s76 = sphi 0, %s75
      %s90 = sphi 0, %s76
      %s94 = sphi 0, %s94
      %s96 = sphi 0, %s94
      %s97 = sphi 0, %s96
      %s111 = sphi 0, %s97
      %s117 = sphi 0, %s119
      %s120 = sphi 0, %s117
      %s121 = sphi 0, %s120
      %s137 = sphi 0, %s121
    $region4: #{tpu_custom_call.1} parent=1 // loop_header_branch
      %21 = sbr.rel (%p19) target = $region8
    $region5: #{tpu_custom_call.1} parent=1 // loop_body
      %s23 = ssub.s32 %s18, 1
      %s24 = ssub.s32 %s18, 2
      %s25 = sadd.s32 %s18, 1
      %s27 = sadd.s32 %s26, 1
      %p30 = scmp.eq.s32.totalorder %s18, 1
      %p31 = scmp.ne.s32.totalorder %s26, %s28
      %p32 = scmp.eq.s32.totalorder %s18, 0
      %p33 = por %p31, %p32
      %p34 = scmp.ne.s32.totalorder %s26, %s28
      %p35 = scmp.eq.s32.totalorder %s23, 1
      %p36 = por %p34, %p35
      %p37 = scmp.ne.s32.totalorder %s28, %s29
      %p38 = scmp.eq.s32.totalorder %s23, 0
      %p39 = por %p37, %p38
      %p40 = scmp.ne.s32.totalorder %s28, %s29
      %p41 = scmp.eq.s32.totalorder %s24, 1
      %p42 = por %p40, %p41
      %p44 = scmp.ne.s32.totalorder %s29, %s43
      %p45 = scmp.eq.s32.totalorder %s24, 0
      %p46 = por %p44, %p45
      %s47 = ssub.s32 %s18, %s25
      %p48 = scmp.eq.s32.totalorder %s47, 0
      %s50 = sadd.s32 %s49, 1
      %s51 = scalar_select %p48, %s49, %s50
      %p54 = pneg %p48
      %p55 = scmp.eq.s32.totalorder %s18, 1
      %p56 = por %p54, %p55
      %p57 = scmp.ne.s32.totalorder %s49, %s52
      %p58 = scmp.eq.s32.totalorder %s18, 0
      %p59 = por %p57, %p58
      %p60 = scmp.ne.s32.totalorder %s49, %s52
      %p61 = scmp.eq.s32.totalorder %s23, 1
      %p62 = por %p60, %p61
      %p63 = scmp.ne.s32.totalorder %s52, %s53
      %p64 = scmp.eq.s32.totalorder %s23, 0
      %p65 = por %p63, %p64
      %p66 = scmp.ne.s32.totalorder %s52, %s53
      %p67 = scmp.eq.s32.totalorder %s24, 1
      %p68 = por %p66, %p67
      %p70 = scmp.ne.s32.totalorder %s53, %s69
      %p71 = scmp.eq.s32.totalorder %s24, 0
      %p72 = por %p70, %p71
      %s74 = sadd.s32 %s73, 1
      %p77 = scmp.eq.s32.totalorder %s18, 1
      %p78 = scmp.ne.s32.totalorder %s73, %s75
      %p79 = scmp.eq.s32.totalorder %s18, 0
      %p80 = por %p78, %p79
      %p81 = scmp.ne.s32.totalorder %s73, %s75
      %p82 = scmp.eq.s32.totalorder %s23, 1
      %p83 = por %p81, %p82
      %p84 = scmp.ne.s32.totalorder %s75, %s76
      %p85 = scmp.eq.s32.totalorder %s23, 0
      %p86 = por %p84, %p85
      %p87 = scmp.ne.s32.totalorder %s75, %s76
      %p88 = scmp.eq.s32.totalorder %s24, 1
      %p89 = por %p87, %p88
      %p91 = scmp.ne.s32.totalorder %s76, %s90
      %p92 = scmp.eq.s32.totalorder %s24, 0
      %p93 = por %p91, %p92
      %s95 = sadd.s32 %s94, 1
      %p98 = scmp.eq.s32.totalorder %s18, 1
      %p99 = scmp.ne.s32.totalorder %s94, %s96
      %p100 = scmp.eq.s32.totalorder %s18, 0
      %p101 = por %p99, %p100
      %p102 = scmp.ne.s32.totalorder %s94, %s96
      %p103 = scmp.eq.s32.totalorder %s23, 1
      %p104 = por %p102, %p103
      %p105 = scmp.ne.s32.totalorder %s96, %s97
      %p106 = scmp.eq.s32.totalorder %s23, 0
      %p107 = por %p105, %p106
      %p108 = scmp.ne.s32.totalorder %s96, %s97
      %p109 = scmp.eq.s32.totalorder %s24, 1
      %p110 = por %p108, %p109
      %p112 = scmp.ne.s32.totalorder %s97, %s111
      %p113 = scmp.eq.s32.totalorder %s24, 0
      %p114 = por %p112, %p113
      %s115 = ssub.s32 %s18, %s25
      %p116 = scmp.eq.s32.totalorder %s115, 0
      %s118 = sadd.s32 %s117, 1
      %s119 = scalar_select %p116, %s117, %s118
      %p122 = pneg %p116
      %p123 = scmp.eq.s32.totalorder %s18, 1
      %p124 = por %p122, %p123
      %p125 = scmp.ne.s32.totalorder %s117, %s120
      %p126 = scmp.eq.s32.totalorder %s18, 0
      %p127 = por %p125, %p126
      %p128 = scmp.ne.s32.totalorder %s117, %s120
      %p129 = scmp.eq.s32.totalorder %s23, 1
      %p130 = por %p128, %p129
      %p131 = scmp.ne.s32.totalorder %s120, %s121
      %p132 = scmp.eq.s32.totalorder %s23, 0
      %p133 = por %p131, %p132
      %p134 = scmp.ne.s32.totalorder %s120, %s121
      %p135 = scmp.eq.s32.totalorder %s24, 1
      %p136 = por %p134, %p135
      %p138 = scmp.ne.s32.totalorder %s121, %s137
      %p139 = scmp.eq.s32.totalorder %s24, 0
      %p140 = por %p138, %p139
      %p141 = scmp.le.s32.totalorder 1, %s18
      %p142 = scmp.lt.s32.totalorder %s18, 3
      %p143 = pnand %p141, %p142
      %p144 = pneg %p143
      // Predicated region
      $region9: #{tpu_custom_call.1} parent=5 // pred_check
        _
      $region10: #{tpu_custom_call.1} parent=5 // pred_check_branch
        %146 = sbr.rel (%p143) target = $region12
      $region11: #{tpu_custom_call.1} parent=5 // pred_region
        %s147 = ssub.s32 %s18, 1
        // Predicated region
        $region13: #{tpu_custom_call.1} parent=11 // pred_check
          %p148 = pneg %p39
        $region14: #{tpu_custom_call.1} parent=11 // pred_check_branch
          %150 = sbr.rel (%p148) target = $region16
        $region15: #{tpu_custom_call.1} parent=11 // pred_region
          _
        $region16: #{tpu_custom_call.1} parent=11 // pred_fallthru
          _
        // Predicated region
        $region17: #{tpu_custom_call.1} parent=11 // pred_check
          %p151 = pneg %p86
        $region18: #{tpu_custom_call.1} parent=11 // pred_check_branch
          %153 = sbr.rel (%p151) target = $region20
        $region19: #{tpu_custom_call.1} parent=11 // pred_region
          %s155 = ssub.s32 512, 512
          %156 = vsyncadd [#allocation7], %s155
          %s157 = sshll.u32 [#allocation6], 4
          %s158 = int_to_ptr.vmem [resolvable:$true] %s157
          %163 = dma.hbm_to_vmem [thread:$0]  %s2, 512, %s158, [#allocation7], 128, 128, 8
        $region20: #{tpu_custom_call.1} parent=11 // pred_fallthru
          _
        // Predicated region
        $region21: #{tpu_custom_call.1} parent=11 // pred_check
          %p164 = pneg %p107
        $region22: #{tpu_custom_call.1} parent=11 // pred_check_branch
          %166 = sbr.rel (%p164) target = $region24
        $region23: #{tpu_custom_call.1} parent=11 // pred_region
          _
        $region24: #{tpu_custom_call.1} parent=11 // pred_fallthru
          _
      $region12: #{tpu_custom_call.1} parent=5 // pred_fallthru
        _
      %p167 = scmp.lt.s32.totalorder %s18, 2
      // Predicated region
      $region25: #{tpu_custom_call.1} parent=5 // pred_check
        %p168 = pneg %p167
      $region26: #{tpu_custom_call.1} parent=5 // pred_check_branch
        %170 = sbr.rel (%p168) target = $region28
      $region27: #{tpu_custom_call.1} parent=5 // pred_region
        // Predicated region
        $region29: #{tpu_custom_call.1} parent=27 // pred_check
          %p171 = pneg %p59
        $region30: #{tpu_custom_call.1} parent=27 // pred_check_branch
          %173 = sbr.rel (%p171) target = $region32
        $region31: #{tpu_custom_call.1} parent=27 // pred_region
          %s174 = sand.u32 %s49, 1
          %s175 = scalar_lea.sflag [#allocation4], %s174
          %s176 = sand.u32 %s49, 1
          %s177 = smul.addr %s176, 8
          %s178 = scalar_lea.vmem [#allocation3], %s177
          %s180 = ssub.s32 128, 128
          %181 = vsyncadd %s175, %s180
          %s182 = smul.addr %s18, 128
          %s183 = scalar_lea.hbm %s1, %s182
          %s185 = sshll.u32 %s178, 4
          %s186 = int_to_ptr.vmem [resolvable:$true] %s185
          %188 = dma.hbm_to_vmem [thread:$0]  %s183, 128, %s186, %s175
        $region32: #{tpu_custom_call.1} parent=27 // pred_fallthru
          _
      $region28: #{tpu_custom_call.1} parent=5 // pred_fallthru
        _
      %p189 = scmp.le.s32.totalorder 1, %s18
      %p190 = scmp.lt.s32.totalorder %s18, 3
      %p191 = pnand %p189, %p190
      %p192 = pneg %p191
      // Predicated region
      $region33: #{tpu_custom_call.1} parent=5 // pred_check
        _
      $region34: #{tpu_custom_call.1} parent=5 // pred_check_branch
        %194 = sbr.rel (%p191) target = $region36
      $region35: #{tpu_custom_call.1} parent=5 // pred_region
        %s195 = ssub.s32 %s18, 1
        %s196 = sand.u32 %s52, 1
        %s197 = scalar_lea.sflag [#allocation4], %s196
        %s198 = sand.u32 %s52, 1
        %s199 = smul.addr %s198, 8
        %s200 = scalar_lea.vmem [#allocation3], %s199
        // Predicated region
        $region37: #{tpu_custom_call.1} parent=35 // pred_check
          %p201 = pneg %p65
        $region38: #{tpu_custom_call.1} parent=35 // pred_check_branch
          %203 = sbr.rel (%p201) target = $region40
        $region39: #{tpu_custom_call.1} parent=35 // pred_region
          %204 = dma.done %s197, 128
        $region40: #{tpu_custom_call.1} parent=35 // pred_fallthru
          _
        // Predicated region
        $region41: #{tpu_custom_call.1} parent=35 // pred_check
          %p205 = pneg %p86
        $region42: #{tpu_custom_call.1} parent=35 // pred_check_branch
          %207 = sbr.rel (%p205) target = $region44
        $region43: #{tpu_custom_call.1} parent=35 // pred_region
          %208 = dma.done [#allocation7], 512
        $region44: #{tpu_custom_call.1} parent=35 // pred_fallthru
          _
        %p209 = pneg %p39
        %p210 = pneg %p36
        %s211 = sand.u32 %s52, 1
        %s212 = scalar_lea.sflag [#allocation4], %s211
        %s213 = sand.u32 %s52, 1
        %s214 = smul.addr %s213, 8
        %s215 = scalar_lea.vmem [#allocation3], %s214
        %p216 = pneg %p65
        %p217 = pneg %p62
        %p218 = pneg %p86
        %p219 = pneg %p83
        %p220 = pneg %p107
        %p221 = pneg %p104
        %p222 = pneg %p133
        %p223 = pneg %p130
        %s224 = sand.u32 %s120, 1
        %s225 = scalar_lea.sflag [#allocation5], %s224
        %s226 = sand.u32 %s120, 1
        %s227 = smul.addr %s226, 8
        %s228 = scalar_lea.vmem [#allocation8], %s227
        %v229 = vld [vmem:[%s200] sm:$0xff]
        %v230 = vld [vmem:[#allocation6] sm:$0xff]
        %v231 = vld [vmem:[#allocation6 + $0x8] sm:$0xff]
        %v232 = vld [vmem:[#allocation6 + $0x10] sm:$0xff]
        %v233 = vld [vmem:[#allocation6 + $0x18] sm:$0xff]
        %v234 = vld [vmem:[%s3] sm:$0x1]
        %v236 = vlaneseq
        %v237 = vshrl.u32 %v236, 7
        %v238 = vsub.s32 0, %v237
        %v239 = vrot.slane %v234, %v238
        %vm241 = vcmask 261120
        %v243 = vsel %vm241, %v229, 0
        %245 = vmatprep.subr.mxu0 0.0
        %246 = vmatpush1.msra.mxu0 %v230
        %247 = vmatprep.subr.mxu0 0.0
        %248 = vmatpush1.msra.mxu0 %v231
        %249 = vmatprep.subr.mxu0 0.0
        %250 = vmatpush1.msra.mxu0 %v232
        %251 = vmatprep.subr.mxu0 0.0
        %252 = vmatpush1.msra.mxu0 %v233
        %253 = vmatprep.subr.mxu0 0.0
        %254 = vmatpush1.msra.mxu0 0.0
        %255 = vmatprep.subr.mxu0 0.0
        %256 = vmatpush1.msra.mxu0 0.0
        %257 = vmatprep.subr.mxu0 0.0
        %258 = vmatpush1.msra.mxu0 0.0
        %259 = vmatprep.subr.mxu0 0.0
        %260 = vmatpush1.msra.mxu0 0.0
        %261 = vmatprep.subr.mxu0 0.0
        %262 = vmatpush1.msra.mxu0 0.0
        %263 = vmatprep.subr.mxu0 0.0
        %264 = vmatpush1.msra.mxu0 0.0
        %265 = vmatprep.subr.mxu0 0.0
        %266 = vmatpush1.msra.mxu0 0.0
        %267 = vmatprep.subr.mxu0 0.0
        %268 = vmatpush1.msra.mxu0 0.0
        %269 = vmatprep.subr.mxu0 0.0
        %270 = vmatpush1.msra.mxu0 0.0
        %271 = vmatprep.subr.mxu0 0.0
        %272 = vmatpush1.msra.mxu0 0.0
        %273 = vmatprep.subr.mxu0 0.0
        %274 = vmatpush1.msra.mxu0 0.0
        %275 = vmatprep.subr.mxu0 0.0
        %276 = vmatpush1.msra.mxu0 0.0
        %277 = vmatprep.subr.mxu0 0.0
        %278 = vmatpush1.msra.mxu0 0.0
        %279 = vmatprep.subr.mxu0 0.0
        %280 = vmatpush1.msra.mxu0 0.0
        %281 = vmatprep.subr.mxu0 0.0
        %282 = vmatpush1.msra.mxu0 0.0
        %283 = vmatprep.subr.mxu0 0.0
        %284 = vmatpush1.msra.mxu0 0.0
        %285 = vmatprep.subr.mxu0 0.0
        %286 = vmatpush1.msra.mxu0 0.0
        %287 = vmatprep.subr.mxu0 0.0
        %288 = vmatpush1.msra.mxu0 0.0
        %289 = vmatprep.subr.mxu0 0.0
        %290 = vmatpush1.msra.mxu0 0.0
        %291 = vmatprep.subr.mxu0 0.0
        %292 = vmatpush1.msra.mxu0 0.0
        %293 = vmatprep.subr.mxu0 0.0
        %294 = vmatpush1.msra.mxu0 0.0
        %295 = vmatprep.subr.mxu0 0.0
        %296 = vmatpush1.msra.mxu0 0.0
        %297 = vmatprep.subr.mxu0 0.0
        %298 = vmatpush1.msra.mxu0 0.0
        %299 = vmatprep.subr.mxu0 0.0
        %300 = vmatpush1.msra.mxu0 0.0
        %301 = vmatprep.subr.mxu0 0.0
        %302 = vmatpush1.msra.mxu0 0.0
        %303 = vmatprep.subr.mxu0 0.0
        %304 = vmatpush1.msra.mxu0 0.0
        %305 = vmatprep.subr.mxu0 0.0
        %306 = vmatpush1.msra.mxu0 0.0
        %307 = vmatprep.subr.mxu0 0.0
        %308 = vmatpush1.msra.mxu0 0.0
        %309 = vmatprep.mubr.f32.mxu0 0.0
        %310 = vmatmul.mubr.f32.gmra.mrb[0].mxu0 %v243
        %v311 = vpop.f32.mrb[0].mxu0
        %v312 = vadd.f32 %v239, %v311
        %v313 = vpop.f32.mrb[0].mxu0
        %314 = vdwg.mxu0
        %315 = vst [vmem:[%s228] sm:$0xff] %v312
        %s316 = sand.u32 %s120, 1
        %s317 = scalar_lea.sflag [#allocation5], %s316
        %s318 = sand.u32 %s120, 1
        %s319 = smul.addr %s318, 8
        %s320 = scalar_lea.vmem [#allocation8], %s319
        // Predicated region
        $region45: #{tpu_custom_call.1} parent=35 // pred_check
          %p321 = pneg %p130
        $region46: #{tpu_custom_call.1} parent=35 // pred_check_branch
          %323 = sbr.rel (%p321) target = $region48
        $region47: #{tpu_custom_call.1} parent=35 // pred_region
          %s325 = ssub.s32 128, 128
          %326 = vsyncadd %s317, %s325
          %s327 = smul.addr %s23, 128
          %s328 = scalar_lea.hbm %s4, %s327
          %s330 = sshll.u32 %s320, 4
          %s331 = int_to_ptr.vmem [resolvable:$true] %s330
          %333 = dma.vmem_to_hbm [thread:$0]  %s331, 128, %s328, %s317
        $region48: #{tpu_custom_call.1} parent=35 // pred_fallthru
          _
      $region36: #{tpu_custom_call.1} parent=5 // pred_fallthru
        _
      %p334 = scmp.le.s32.totalorder 2, %s18
      // Predicated region
      $region49: #{tpu_custom_call.1} parent=5 // pred_check
        %p335 = pneg %p334
      $region50: #{tpu_custom_call.1} parent=5 // pred_check_branch
        %337 = sbr.rel (%p335) target = $region52
      $region51: #{tpu_custom_call.1} parent=5 // pred_region
        %s338 = ssub.s32 %s18, 2
        // Predicated region
        $region53: #{tpu_custom_call.1} parent=51 // pred_check
          %p339 = pneg %p136
        $region54: #{tpu_custom_call.1} parent=51 // pred_check_branch
          %341 = sbr.rel (%p339) target = $region56
        $region55: #{tpu_custom_call.1} parent=51 // pred_region
          %s342 = sand.u32 %s121, 1
          %s343 = scalar_lea.sflag [#allocation5], %s342
          %s344 = sand.u32 %s121, 1
          %s345 = smul.addr %s344, 8
          %s346 = scalar_lea.vmem [#allocation8], %s345
          %347 = dma.done %s343, 128
        $region56: #{tpu_custom_call.1} parent=51 // pred_fallthru
          _
      $region52: #{tpu_custom_call.1} parent=5 // pred_fallthru
        _
    $region6: #{tpu_custom_call.1} parent=1 // loop_footer
      %s22 = sadd.s32 1, %s18
    $region7: #{tpu_custom_call.1} parent=1 // loop_footer_branch
      %17 = sbr.rel target = $region3
    $region8: #{tpu_custom_call.1} parent=1 // loop_exit
      _
    %348 = vsyncpa [#allocation4], 1
    %s349 = scalar_lea.sflag [#allocation4], 1
    %350 = vsyncpa %s349, 1
    %351 = vsyncpa [#allocation7], 1
    %352 = vsyncpa [#allocation5], 1
    %s353 = scalar_lea.sflag [#allocation5], 1
    %354 = vsyncpa %s353, 1

</llo_original>
